<compile_context>
chip_gen: v7x
topology: tpu7x:2x2x1
jax: 0.10.0
libtpu: 0.0.40
codegen_flags: <defaults>
</compile_context>

<pallas_src>
import functools

import jax
import jax.numpy as jnp
from jax import lax
from jax.experimental import pallas as pl
from jax.experimental.pallas import tpu as pltpu

LANE = 128
MAX_TILE_R = 2048   # (2048, 128) f32 block = 1 MiB; 2 inputs x 2 bufs + 2 scratch = 6 MiB
N_CORES = 2         # leading "parallel" grid axis (exploited by 2-TC chips)


def _int_pow(x, n):
    """x**n via repeated multiplication when n is a non-negative integer.

    Keeps the work on the VPU (multiplies) instead of lowering jnp.power to
    exp(n*log(x)) on the single-slot EUP. Falls back to jnp.power otherwise.
    """
    nf = float(n)
    if nf.is_integer() and nf >= 0:
        k = int(nf)
        if k == 0:
            return jnp.ones_like(x)
        result = None
        y = x
        while k:
            if k & 1:
                result = y if result is None else result * y
            y = y * y
            k >>= 1
        return result
    return jnp.power(x, n)


def _centerloss_kernel(pred_ref, gt_ref, loss_ref, npos_ref,
                       acc_loss, acc_npos, *,
                       alpha, beta, eps, tile_r, n_rows):
    c = pl.program_id(0)
    i = pl.program_id(1)
    n_inner = pl.num_programs(1)

    @pl.when(i == 0)
    def _():
        acc_loss[...] = jnp.zeros_like(acc_loss)
        acc_npos[...] = jnp.zeros_like(acc_npos)

    # Global row index of every element in this (possibly clamped / partial)
    # block; rows >= n_rows are padding or garbage and are masked out.
    row_start = (c * n_inner + i) * tile_r
    row_ids = lax.broadcasted_iota(jnp.int32, (tile_r, LANE), 0) + row_start
    valid = row_ids < n_rows

    p = pred_ref[...]
    g = gt_ref[...]

    pos_m = valid & (g == 1.0)
    neg_m = valid & (g < 1.0)

    pc = jnp.clip(p, eps, 1.0 - eps)
    one_minus_pc = 1.0 - pc

    # Single log per element: select its argument first (log(pc) for positives,
    # log(1-pc) for everything else; masked-out lanes get weight 0 below).
    l = jnp.log(jnp.where(pos_m, pc, one_minus_pc))

    pos_w = _int_pow(one_minus_pc, alpha)                  # (1-p)^alpha
    neg_w = _int_pow(pc, alpha) * _int_pow(1.0 - g, beta)  # p^alpha * (1-g)^beta

    # Select the weight (2 selects), then one multiply: cheaper than weighting
    # both branches and selecting the product.
    w = jnp.where(pos_m, pos_w, jnp.where(neg_m, neg_w, 0.0))

    acc_loss[...] += l * w
    acc_npos[...] += pos_m.astype(jnp.float32)

    @pl.when(i == n_inner - 1)
    def _():
        loss_ref[...] = jnp.zeros_like(loss_ref) + jnp.sum(acc_loss[...])
        npos_ref[...] = jnp.zeros_like(npos_ref) + jnp.sum(acc_npos[...])


def center_loss(preds, gt, alpha=2, beta=4, eps=1e-4):
    B, C, H, W = preds.shape

    # Exactly mirror the PyTorch flattening semantics:
    #   pred: NCHW -> NHWC -> flatten ; gt: plain reshape (raw memory order).
    # TODO(synk): if gt is actually stored channel-last upstream, the plain
    # reshape already matches and this transpose is the only wrapper copy.
    pred_flat = jnp.transpose(preds, (0, 2, 3, 1)).reshape(-1).astype(jnp.float32)
    gt_flat = jnp.reshape(gt, (-1,)).astype(jnp.float32)

    total = pred_flat.shape[0]
    pad = (-total) % LANE
    if pad:
        # pred=0.5 (harmless after clip), gt=2.0 -> neither pos (==1) nor
        # neg (<1): padded lanes contribute nothing to any sum.
        pred_flat = jnp.pad(pred_flat, (0, pad), constant_values=0.5)
        gt_flat = jnp.pad(gt_flat, (0, pad), constant_values=2.0)

    pred2d = pred_flat.reshape(-1, LANE)
    gt2d = gt_flat.reshape(-1, LANE)
    rows = pred2d.shape[0]

    tile_r = min(MAX_TILE_R, -(-rows // 8) * 8)   # sublane-aligned block rows
    n_blocks = -(-rows // tile_r)
    inner = -(-n_blocks // N_CORES)
    grid = (N_CORES, inner)

    def in_map(c, i):
        # Clamp so an over-split core never issues a fully out-of-bounds DMA;
        # the in-kernel row mask zeroes any duplicated contribution.
        return (jnp.minimum(c * inner + i, n_blocks - 1), 0)

    kernel = functools.partial(
        _centerloss_kernel,
        alpha=float(alpha), beta=float(beta), eps=float(eps),
        tile_r=tile_r, n_rows=rows)

    part_shape = jax.ShapeDtypeStruct((N_CORES, 1, 1), jnp.float32)
    part_spec = pl.BlockSpec((1, 1, 1), lambda c, i: (c, 0, 0))

    loss_part, npos_part = pl.pallas_call(
        kernel,
        out_shape=(part_shape, part_shape),
        grid_spec=pltpu.PrefetchScalarGridSpec(
            num_scalar_prefetch=0,
            grid=grid,
            in_specs=[
                pl.BlockSpec((tile_r, LANE), in_map),
                pl.BlockSpec((tile_r, LANE), in_map),
            ],
            out_specs=[part_spec, part_spec],
            scratch_shapes=[pltpu.VMEM((tile_r, LANE), jnp.float32),
                            pltpu.VMEM((tile_r, LANE), jnp.float32)]),
        compiler_params=pltpu.CompilerParams(
            dimension_semantics=("parallel", "arbitrary")),
    )(pred2d, gt2d)

    loss_sum = jnp.sum(loss_part)
    num_pos = jnp.sum(npos_part)
    # pos_loss == 0 whenever num_pos == 0, so one formula covers both PyTorch
    # branches: -(pos+neg)/max(num_pos, 1).
    return -loss_sum / jnp.maximum(num_pos, 1.0)


def _reference(preds, gt, alpha=2, beta=4, eps=1e-4):
    # Pure-JAX reference mirroring the PyTorch module.
    B, C, H, W = preds.shape
    pred = jnp.transpose(preds, (0, 2, 3, 1)).reshape(-1, C)
    g = jnp.reshape(gt, (-1, C))
    pos = g == 1.0
    neg = g < 1.0
    num_pos = jnp.sum(pos.astype(jnp.float32))
    p = jnp.clip(pred, eps, 1.0 - eps)
    pos_loss = jnp.sum(jnp.where(pos, jnp.log(p) * (1.0 - p) ** alpha, 0.0))
    neg_loss = jnp.sum(jnp.where(neg,
                                 jnp.log(1.0 - p) * p ** alpha * (1.0 - g) ** beta,
                                 0.0))
    return jnp.where(num_pos == 0, -neg_loss,
                     -(pos_loss + neg_loss) / jnp.maximum(num_pos, 1.0))


if __name__ == "__main__":
    key = jax.random.PRNGKey(0)
    k1, k2, k3 = jax.random.split(key, 3)

    B, C, H, W = 2, 4, 16, 16
    # preds are probabilities in (0, 1)
    preds = jax.nn.sigmoid(jax.random.normal(k1, (B, C, H, W), dtype=jnp.float32))
    # gt: some exact ones (positives), rest in [0, 1) (negatives)
    u = jax.random.uniform(k2, (B, C, H, W), dtype=jnp.float32)
    m = jax.random.uniform(k3, (B, C, H, W), dtype=jnp.float32)
    gt = jnp.where(m > 0.95, 1.0, u * 0.99)

    out = center_loss(preds, gt)
    out = jax.block_until_ready(out)

    ref = _reference(preds, gt)
    assert jnp.allclose(out, ref, rtol=1e-5, atol=1e-5), (out, ref)

    print("KERNEL_OK")
</pallas_src>

<mosaic_0001>
module attributes {stable_mosaic.version = 11 : i64} {
  func.func @_centerloss_kernel(%arg0: i32, %arg1: i32, %arg2: memref<16x128xf32, #tpu.memory_space<vmem>>, %arg3: memref<16x128xf32, #tpu.memory_space<vmem>>, %arg4: memref<1x1x1xf32, #tpu.memory_space<vmem>>, %arg5: memref<1x1x1xf32, #tpu.memory_space<vmem>>, %arg6: memref<16x128xf32, #tpu.memory_space<vmem>>, %arg7: memref<16x128xf32, #tpu.memory_space<vmem>>) attributes {dimension_semantics = [#tpu.dimension_semantics<parallel>, #tpu.dimension_semantics<arbitrary>], iteration_bounds = array<i64: 2, 1>, scalar_prefetch = 0 : i64, scratch_operands = 2 : i64, tpu.core_type = #tpu.core_type<tc>, window_params = [{transform_indices = @transform_0, window_bounds = array<i64: 16, 128>}, {transform_indices = @transform_1, window_bounds = array<i64: 16, 128>}, {transform_indices = @transform_2, window_bounds = array<i64: 1, 1, 1>}, {transform_indices = @transform_3, window_bounds = array<i64: 1, 1, 1>}]} {
    %c0_i32 = arith.constant 0 : i32
    %0 = arith.cmpi eq, %arg1, %c0_i32 : i32
    %1 = arith.extui %0 : i1 to i32
    %c0_i32_0 = arith.constant 0 : i32
    %2 = arith.cmpi ne, %1, %c0_i32_0 : i32
    scf.if %2 {
      %cst_21 = arith.constant 0.000000e+00 : f32
      %49 = vector.broadcast %cst_21 : f32 to vector<16x128xf32>
      %c0_22 = arith.constant 0 : index
      %c0_23 = arith.constant 0 : index
      %50 = vector.load %arg6[%c0_22, %c0_23] : memref<16x128xf32, #tpu.memory_space<vmem>>, vector<16x128xf32>
      tpu.vector_store %arg6[%c0_22, %c0_23], %49 {strides = array<i32>} : memref<16x128xf32, #tpu.memory_space<vmem>>, vector<16x128xf32>,
      %cst_24 = arith.constant 0.000000e+00 : f32
      %51 = vector.broadcast %cst_24 : f32 to vector<16x128xf32>
      %c0_25 = arith.constant 0 : index
      %c0_26 = arith.constant 0 : index
      %52 = vector.load %arg7[%c0_25, %c0_26] : memref<16x128xf32, #tpu.memory_space<vmem>>, vector<16x128xf32>
      tpu.vector_store %arg7[%c0_25, %c0_26], %51 {strides = array<i32>} : memref<16x128xf32, #tpu.memory_space<vmem>>, vector<16x128xf32>,
    } else {
    }
    %c1_i32 = arith.constant 1 : i32
    %3 = arith.muli %arg0, %c1_i32 : i32
    %4 = arith.addi %3, %arg1 : i32
    %c16_i32 = arith.constant 16 : i32
    %5 = arith.muli %4, %c16_i32 : i32
    %6 = tpu.iota {dimensions = array<i32: 0>} : vector<16x128xi32>
    %7 = vector.broadcast %5 : i32 to vector<16x128xi32>
    %8 = arith.addi %6, %7 : vector<16x128xi32>
    %c16_i32_1 = arith.constant 16 : i32
    %9 = vector.broadcast %c16_i32_1 : i32 to vector<16x128xi32>
    %10 = arith.cmpi slt, %8, %9 : vector<16x128xi32>
    %c0 = arith.constant 0 : index
    %c0_2 = arith.constant 0 : index
    %11 = vector.load %arg2[%c0, %c0_2] : memref<16x128xf32, #tpu.memory_space<vmem>>, vector<16x128xf32>
    %c0_3 = arith.constant 0 : index
    %c0_4 = arith.constant 0 : index
    %12 = vector.load %arg3[%c0_3, %c0_4] : memref<16x128xf32, #tpu.memory_space<vmem>>, vector<16x128xf32>
    %cst = arith.constant 1.000000e+00 : f32
    %13 = vector.broadcast %cst : f32 to vector<16x128xf32>
    %14 = arith.cmpf oeq, %12, %13 : vector<16x128xf32>
    %15 = arith.andi %10, %14 : vector<16x128xi1>
    %cst_5 = arith.constant 1.000000e+00 : f32
    %16 = vector.broadcast %cst_5 : f32 to vector<16x128xf32>
    %17 = arith.cmpf olt, %12, %16 : vector<16x128xf32>
    %18 = arith.andi %10, %17 : vector<16x128xi1>
    %cst_6 = arith.constant 9.99999974E-5 : f32
    %cst_7 = arith.constant 0.999899983 : f32
    %19 = vector.broadcast %cst_6 : f32 to vector<16x128xf32>
    %20 = arith.maximumf %19, %11 : vector<16x128xf32>
    %21 = vector.broadcast %cst_7 : f32 to vector<16x128xf32>
    %22 = arith.minimumf %21, %20 : vector<16x128xf32>
    %cst_8 = arith.constant 1.000000e+00 : f32
    %23 = vector.broadcast %cst_8 : f32 to vector<16x128xf32>
    %24 = arith.subf %23, %22 : vector<16x128xf32>
    %25 = arith.select %15, %22, %24 : vector<16x128xi1>, vector<16x128xf32>
    %26 = math.log %25 : vector<16x128xf32>
    %27 = arith.mulf %24, %24 : vector<16x128xf32>
    %28 = arith.mulf %22, %22 : vector<16x128xf32>
    %cst_9 = arith.constant 1.000000e+00 : f32
    %29 = vector.broadcast %cst_9 : f32 to vector<16x128xf32>
    %30 = arith.subf %29, %12 : vector<16x128xf32>
    %31 = arith.mulf %30, %30 : vector<16x128xf32>
    %32 = arith.mulf %31, %31 : vector<16x128xf32>
    %33 = arith.mulf %28, %32 : vector<16x128xf32>
    %cst_10 = arith.constant 0.000000e+00 : f32
    %34 = vector.broadcast %cst_10 : f32 to vector<16x128xf32>
    %35 = arith.select %18, %33, %34 : vector<16x128xi1>, vector<16x128xf32>
    %36 = arith.select %15, %27, %35 : vector<16x128xi1>, vector<16x128xf32>
    %c0_11 = arith.constant 0 : index
    %c0_12 = arith.constant 0 : index
    %37 = vector.load %arg6[%c0_11, %c0_12] : memref<16x128xf32, #tpu.memory_space<vmem>>, vector<16x128xf32>
    %38 = arith.mulf %26, %36 : vector<16x128xf32>
    %39 = arith.addf %37, %38 : vector<16x128xf32>
    %c0_13 = arith.constant 0 : index
    %c0_14 = arith.constant 0 : index
    %40 = vector.load %arg6[%c0_13, %c0_14] : memref<16x128xf32, #tpu.memory_space<vmem>>, vector<16x128xf32>
    tpu.vector_store %arg6[%c0_13, %c0_14], %39 {strides = array<i32>} : memref<16x128xf32, #tpu.memory_space<vmem>>, vector<16x128xf32>,
    %c0_15 = arith.constant 0 : index
    %c0_16 = arith.constant 0 : index
    %41 = vector.load %arg7[%c0_15, %c0_16] : memref<16x128xf32, #tpu.memory_space<vmem>>, vector<16x128xf32>
    %42 = arith.extui %15 : vector<16x128xi1> to vector<16x128xi32>
    %43 = arith.sitofp %42 : vector<16x128xi32> to vector<16x128xf32>
    %44 = arith.addf %41, %43 : vector<16x128xf32>
    %c0_17 = arith.constant 0 : index
    %c0_18 = arith.constant 0 : index
    %45 = vector.load %arg7[%c0_17, %c0_18] : memref<16x128xf32, #tpu.memory_space<vmem>>, vector<16x128xf32>
    tpu.vector_store %arg7[%c0_17, %c0_18], %44 {strides = array<i32>} : memref<16x128xf32, #tpu.memory_space<vmem>>, vector<16x128xf32>,
    %c0_i32_19 = arith.constant 0 : i32
    %46 = arith.cmpi eq, %arg1, %c0_i32_19 : i32
    %47 = arith.extui %46 : i1 to i32
    %c0_i32_20 = arith.constant 0 : i32
    %48 = arith.cmpi ne, %47, %c0_i32_20 : i32
    scf.if %48 {
      %cst_21 = arith.constant 0.000000e+00 : f32
      %49 = vector.broadcast %cst_21 : f32 to vector<1x1x1xf32>
      %c0_22 = arith.constant 0 : index
      %c0_23 = arith.constant 0 : index
      %50 = vector.load %arg6[%c0_22, %c0_23] : memref<16x128xf32, #tpu.memory_space<vmem>>, vector<16x128xf32>
      %51 = vector.shape_cast %50 : vector<16x128xf32> to vector<1x16x128xf32>
      %cst_24 = arith.constant dense<0.000000e+00> : vector<1xf32>
      %52 = vector.multi_reduction <add>, %51, %cst_24 [1, 2] : vector<1x16x128xf32> to vector<1xf32>
      %53 = vector.shape_cast %52 : vector<1xf32> to vector<1x1x1xf32>
      %54 = vector.extract %53[0, 0, 0] : f32 from vector<1x1x1xf32>
      %55 = vector.broadcast %54 : f32 to vector<1x1x1xf32>
      %56 = arith.addf %49, %55 : vector<1x1x1xf32>
      %c0_25 = arith.constant 0 : index
      %c0_26 = arith.constant 0 : index
      %c0_27 = arith.constant 0 : index
      %57 = vector.load %arg4[%c0_25, %c0_26, %c0_27] : memref<1x1x1xf32, #tpu.memory_space<vmem>>, vector<1x1x1xf32>
      tpu.vector_store %arg4[%c0_25, %c0_26, %c0_27], %56 {strides = array<i32>} : memref<1x1x1xf32, #tpu.memory_space<vmem>>, vector<1x1x1xf32>,
      %cst_28 = arith.constant 0.000000e+00 : f32
      %58 = vector.broadcast %cst_28 : f32 to vector<1x1x1xf32>
      %c0_29 = arith.constant 0 : index
      %c0_30 = arith.constant 0 : index
      %59 = vector.load %arg7[%c0_29, %c0_30] : memref<16x128xf32, #tpu.memory_space<vmem>>, vector<16x128xf32>
      %60 = vector.shape_cast %59 : vector<16x128xf32> to vector<1x16x128xf32>
      %cst_31 = arith.constant dense<0.000000e+00> : vector<1xf32>
      %61 = vector.multi_reduction <add>, %60, %cst_31 [1, 2] : vector<1x16x128xf32> to vector<1xf32>
      %62 = vector.shape_cast %61 : vector<1xf32> to vector<1x1x1xf32>
      %63 = vector.extract %62[0, 0, 0] : f32 from vector<1x1x1xf32>
      %64 = vector.broadcast %63 : f32 to vector<1x1x1xf32>
      %65 = arith.addf %58, %64 : vector<1x1x1xf32>
      %c0_32 = arith.constant 0 : index
      %c0_33 = arith.constant 0 : index
      %c0_34 = arith.constant 0 : index
      %66 = vector.load %arg5[%c0_32, %c0_33, %c0_34] : memref<1x1x1xf32, #tpu.memory_space<vmem>>, vector<1x1x1xf32>
      tpu.vector_store %arg5[%c0_32, %c0_33, %c0_34], %65 {strides = array<i32>} : memref<1x1x1xf32, #tpu.memory_space<vmem>>, vector<1x1x1xf32>,
    } else {
    }
    return
  }
  func.func @transform_0(%arg0: i32, %arg1: i32) -> (i32, i32) {
    %c1_i32 = arith.constant 1 : i32
    %0 = arith.muli %arg0, %c1_i32 : i32
    %1 = arith.addi %0, %arg1 : i32
    %c0_i32 = arith.constant 0 : i32
    %2 = arith.minsi %1, %c0_i32 : i32
    %c0_i32_0 = arith.constant 0 : i32
    %c0_i32_1 = arith.constant 0 : i32
    return %2, %c0_i32_0 : i32, i32
  }
  func.func @transform_1(%arg0: i32, %arg1: i32) -> (i32, i32) {
    %c1_i32 = arith.constant 1 : i32
    %0 = arith.muli %arg0, %c1_i32 : i32
    %1 = arith.addi %0, %arg1 : i32
    %c0_i32 = arith.constant 0 : i32
    %2 = arith.minsi %1, %c0_i32 : i32
    %c0_i32_0 = arith.constant 0 : i32
    %c0_i32_1 = arith.constant 0 : i32
    return %2, %c0_i32_0 : i32, i32
  }
  func.func @transform_2(%arg0: i32, %arg1: i32) -> (i32, i32, i32) {
    %c0_i32 = arith.constant 0 : i32
    %c0_i32_0 = arith.constant 0 : i32
    %c0_i32_1 = arith.constant 0 : i32
    return %arg0, %c0_i32, %c0_i32_0 : i32, i32, i32
  }
  func.func @transform_3(%arg0: i32, %arg1: i32) -> (i32, i32, i32) {
    %c0_i32 = arith.constant 0 : i32
    %c0_i32_0 = arith.constant 0 : i32
    %c0_i32_1 = arith.constant 0 : i32
    return %arg0, %c0_i32, %c0_i32_0 : i32, i32, i32
  }
}

</mosaic_0001>

<llo_original>
// kernel: tpu_custom_call.1
$region0: #{tpu_custom_call.1}
  #allocation0 [shape = 'u32[]', space=smem, size = 0x4, offset = 0x4, fixed_abs, tag = 'smem constant byte address 0x4 - core index']
  #allocation1 [shape = 'u32[144,128]{1,0:T(1,128)}', space=vmem, size = 0x12000, scoped, tag = 'internal scratch']
  #allocation2 [shape = 'f32[16,128]{1,0:T(8,128)}', space=vmem, size = 0x2000, scoped, tag = 'scratch operand']
  #allocation3 [shape = 'f32[16,128]{1,0:T(8,128)}', space=vmem, size = 0x2000, scoped, tag = 'scratch operand']
  %s0 = inlined_call_operand.hbm [shape: f32[16,128], index: 0, kind: input, shape index: {}]
  %s1 = inlined_call_operand.hbm [shape: f32[16,128], index: 1, kind: input, shape index: {}]
  %s2 = inlined_call_operand.vmem [shape: f32[2,1,1], index: 2, kind: output, shape index: {0}]
  %s3 = inlined_call_operand.vmem [shape: f32[2,1,1], index: 3, kind: output, shape index: {1}]
  %4 = xla_tuple %s2, %s3
  %s5 = sld [smem:[#allocation0]]
  $region65: #{tpu_custom_call.1} parent=0
    _
  %s7 = ssub.s32 1, %s5
  %s8 = scalar_select 0, %s7, %s5
  $region1: #{tpu_custom_call.1} parent=0
    #allocation4 [shape = 'u8[16384]{0}', space=vmem, size = 0x4000, scoped, tag = 'input window, operand 0']
    #allocation5 [shape = 's32[2]{0}', space=sflag, size = 0x8, scoped, tag = 'scoped memory for tpu_custom_call.1']
    #allocation6 [shape = 'u8[16384]{0}', space=vmem, size = 0x4000, scoped, tag = 'input window, operand 1']
    #allocation7 [shape = 's32[2]{0}', space=sflag, size = 0x8, scoped, tag = 'scoped memory for tpu_custom_call.1']
    %9 = vsyncpa [#allocation5], 0
    %s10 = scalar_lea.sflag [#allocation5], 1
    %11 = vsyncpa %s10, 0
    %12 = vsyncpa [#allocation7], 0
    %s13 = scalar_lea.sflag [#allocation7], 1
    %14 = vsyncpa %s13, 0
    loop: start=0, step=1, limit=4
    $region2: #{tpu_custom_call.1} parent=1 // loop_pre_header
      _
    $region3: #{tpu_custom_call.1} parent=1 // loop_header
      %s16 = sphi 0, %s20
      %p17 = scmp.ge.s32.totalorder %s16, 4
      %s23 = sphi 0, %s35
      %s24 = sphi 0, %s31
      %s25 = sphi 0, %s23
      %s26 = sphi 0, %s24
      %s27 = sphi 0, %s25
      %s28 = sphi 0, %s26
      %s44 = sphi 0, %s46
      %s47 = sphi 0, %s44
      %s48 = sphi 0, %s47
      %s64 = sphi 0, %s48
      %s76 = sphi 0, %s78
      %s79 = sphi 0, %s76
      %s80 = sphi 0, %s79
      %s96 = sphi 0, %s80
      %s102 = sphi 0, %s104
      %s105 = sphi 0, %s102
      %s106 = sphi 0, %s105
      %s122 = sphi 0, %s106
      %s128 = sphi 0, %s130
      %s131 = sphi 0, %s128
      %s132 = sphi 0, %s131
      %s148 = sphi 0, %s132
    $region4: #{tpu_custom_call.1} parent=1 // loop_header_branch
      %19 = sbr.rel (%p17) target = $region8
    $region5: #{tpu_custom_call.1} parent=1 // loop_body
      %s21 = ssub.s32 %s16, 1
      %s22 = ssub.s32 %s16, 2
      %s29 = sadd.s32 1, %s24
      %p30 = scmp.ge.s32.totalorder %s29, 1
      %s31 = scalar_select %p30, 0, %s29
      %s32 = sadd.s32 1, %s23
      %s33 = scalar_select %p30, %s32, %s23
      %p34 = scmp.ge.s32.totalorder %s33, 2
      %s35 = scalar_select %p34, 0, %s33
      %s36 = sadd.s32 %s23, %s24
      %p37 = scmp.lt.s32.totalorder %s36, 0
      %s38 = scalar_select %p37, %s36, 0
      %s39 = sadd.s32 %s35, %s31
      %p40 = scmp.lt.s32.totalorder %s39, 0
      %s41 = scalar_select %p40, %s39, 0
      %s42 = ssub.s32 %s38, %s41
      %p43 = scmp.eq.s32.totalorder %s42, 0
      %s45 = sadd.s32 %s44, 1
      %s46 = scalar_select %p43, %s44, %s45
      %p49 = pneg %p43
      %p50 = scmp.eq.s32.totalorder %s16, 1
      %p51 = por %p49, %p50
      %p52 = scmp.ne.s32.totalorder %s44, %s47
      %p53 = scmp.eq.s32.totalorder %s16, 0
      %p54 = por %p52, %p53
      %p55 = scmp.ne.s32.totalorder %s44, %s47
      %p56 = scmp.eq.s32.totalorder %s21, 1
      %p57 = por %p55, %p56
      %p58 = scmp.ne.s32.totalorder %s47, %s48
      %p59 = scmp.eq.s32.totalorder %s21, 0
      %p60 = por %p58, %p59
      %p61 = scmp.ne.s32.totalorder %s47, %s48
      %p62 = scmp.eq.s32.totalorder %s22, 1
      %p63 = por %p61, %p62
      %p65 = scmp.ne.s32.totalorder %s48, %s64
      %p66 = scmp.eq.s32.totalorder %s22, 0
      %p67 = por %p65, %p66
      %s68 = sadd.s32 %s23, %s24
      %p69 = scmp.lt.s32.totalorder %s68, 0
      %s70 = scalar_select %p69, %s68, 0
      %s71 = sadd.s32 %s35, %s31
      %p72 = scmp.lt.s32.totalorder %s71, 0
      %s73 = scalar_select %p72, %s71, 0
      %s74 = ssub.s32 %s70, %s73
      %p75 = scmp.eq.s32.totalorder %s74, 0
      %s77 = sadd.s32 %s76, 1
      %s78 = scalar_select %p75, %s76, %s77
      %p81 = pneg %p75
      %p82 = scmp.eq.s32.totalorder %s16, 1
      %p83 = por %p81, %p82
      %p84 = scmp.ne.s32.totalorder %s76, %s79
      %p85 = scmp.eq.s32.totalorder %s16, 0
      %p86 = por %p84, %p85
      %p87 = scmp.ne.s32.totalorder %s76, %s79
      %p88 = scmp.eq.s32.totalorder %s21, 1
      %p89 = por %p87, %p88
      %p90 = scmp.ne.s32.totalorder %s79, %s80
      %p91 = scmp.eq.s32.totalorder %s21, 0
      %p92 = por %p90, %p91
      %p93 = scmp.ne.s32.totalorder %s79, %s80
      %p94 = scmp.eq.s32.totalorder %s22, 1
      %p95 = por %p93, %p94
      %p97 = scmp.ne.s32.totalorder %s80, %s96
      %p98 = scmp.eq.s32.totalorder %s22, 0
      %p99 = por %p97, %p98
      %s100 = ssub.s32 %s23, %s35
      %p101 = scmp.eq.s32.totalorder %s100, 0
      %s103 = sadd.s32 %s102, 1
      %s104 = scalar_select %p101, %s102, %s103
      %p107 = pneg %p101
      %p108 = scmp.eq.s32.totalorder %s16, 1
      %p109 = por %p107, %p108
      %p110 = scmp.ne.s32.totalorder %s102, %s105
      %p111 = scmp.eq.s32.totalorder %s16, 0
      %p112 = por %p110, %p111
      %p113 = scmp.ne.s32.totalorder %s102, %s105
      %p114 = scmp.eq.s32.totalorder %s21, 1
      %p115 = por %p113, %p114
      %p116 = scmp.ne.s32.totalorder %s105, %s106
      %p117 = scmp.eq.s32.totalorder %s21, 0
      %p118 = por %p116, %p117
      %p119 = scmp.ne.s32.totalorder %s105, %s106
      %p120 = scmp.eq.s32.totalorder %s22, 1
      %p121 = por %p119, %p120
      %p123 = scmp.ne.s32.totalorder %s106, %s122
      %p124 = scmp.eq.s32.totalorder %s22, 0
      %p125 = por %p123, %p124
      %s126 = ssub.s32 %s23, %s35
      %p127 = scmp.eq.s32.totalorder %s126, 0
      %s129 = sadd.s32 %s128, 1
      %s130 = scalar_select %p127, %s128, %s129
      %p133 = pneg %p127
      %p134 = scmp.eq.s32.totalorder %s16, 1
      %p135 = por %p133, %p134
      %p136 = scmp.ne.s32.totalorder %s128, %s131
      %p137 = scmp.eq.s32.totalorder %s16, 0
      %p138 = por %p136, %p137
      %p139 = scmp.ne.s32.totalorder %s128, %s131
      %p140 = scmp.eq.s32.totalorder %s21, 1
      %p141 = por %p139, %p140
      %p142 = scmp.ne.s32.totalorder %s131, %s132
      %p143 = scmp.eq.s32.totalorder %s21, 0
      %p144 = por %p142, %p143
      %p145 = scmp.ne.s32.totalorder %s131, %s132
      %p146 = scmp.eq.s32.totalorder %s22, 1
      %p147 = por %p145, %p146
      %p149 = scmp.ne.s32.totalorder %s132, %s148
      %p150 = scmp.eq.s32.totalorder %s22, 0
      %p151 = por %p149, %p150
      %p152 = scmp.le.s32.totalorder 1, %s16
      %p153 = scmp.lt.s32.totalorder %s16, 3
      %p154 = pnand %p152, %p153
      %p155 = pneg %p154
      // Predicated region
      $region9: #{tpu_custom_call.1} parent=5 // pred_check
        _
      $region10: #{tpu_custom_call.1} parent=5 // pred_check_branch
        %157 = sbr.rel (%p154) target = $region12
      $region11: #{tpu_custom_call.1} parent=5 // pred_region
        %s158 = ssub.s32 %s16, 1
      $region12: #{tpu_custom_call.1} parent=5 // pred_fallthru
        _
      %p159 = scmp.lt.s32.totalorder %s16, 2
      // Predicated region
      $region13: #{tpu_custom_call.1} parent=5 // pred_check
        %p160 = pneg %p159
      $region14: #{tpu_custom_call.1} parent=5 // pred_check_branch
        %162 = sbr.rel (%p160) target = $region16
      $region15: #{tpu_custom_call.1} parent=5 // pred_region
        // Predicated region
        $region17: #{tpu_custom_call.1} parent=15 // pred_check
          %p163 = pneg %p54
        $region18: #{tpu_custom_call.1} parent=15 // pred_check_branch
          %165 = sbr.rel (%p163) target = $region20
        $region19: #{tpu_custom_call.1} parent=15 // pred_region
          %s166 = sand.u32 %s44, 1
          %s167 = scalar_lea.sflag [#allocation5], %s166
          %s168 = sand.u32 %s44, 1
          %s169 = smul.addr %s168, 16
          %s170 = scalar_lea.vmem [#allocation4], %s169
          %s171 = sadd.s32 %s23, %s24
          %p172 = scmp.lt.s32.totalorder %s171, 0
          %s173 = scalar_select %p172, %s171, 0
          %s174 = smul.u32 2, %s173
          %s176 = ssub.s32 256, 256
          %177 = vsyncadd %s167, %s176
          %s178 = smul.addr %s174, 128
          %s179 = scalar_lea.hbm %s0, %s178
          %s180 = sshll.u32 %s170, 4
          %s181 = int_to_ptr.vmem [resolvable:$true] %s180
          %186 = dma.hbm_to_vmem [thread:$0]  %s179, 256, %s181, %s167, 128, 128, 8
        $region20: #{tpu_custom_call.1} parent=15 // pred_fallthru
          _
        // Predicated region
        $region21: #{tpu_custom_call.1} parent=15 // pred_check
          %p187 = pneg %p86
        $region22: #{tpu_custom_call.1} parent=15 // pred_check_branch
          %189 = sbr.rel (%p187) target = $region24
        $region23: #{tpu_custom_call.1} parent=15 // pred_region
          %s190 = sand.u32 %s76, 1
          %s191 = scalar_lea.sflag [#allocation7], %s190
          %s192 = sand.u32 %s76, 1
          %s193 = smul.addr %s192, 16
          %s194 = scalar_lea.vmem [#allocation6], %s193
          %s195 = sadd.s32 %s23, %s24
          %p196 = scmp.lt.s32.totalorder %s195, 0
          %s197 = scalar_select %p196, %s195, 0
          %s198 = smul.u32 2, %s197
          %s200 = ssub.s32 256, 256
          %201 = vsyncadd %s191, %s200
          %s202 = smul.addr %s198, 128
          %s203 = scalar_lea.hbm %s1, %s202
          %s204 = sshll.u32 %s194, 4
          %s205 = int_to_ptr.vmem [resolvable:$true] %s204
          %210 = dma.hbm_to_vmem [thread:$0]  %s203, 256, %s205, %s191, 128, 128, 8
        $region24: #{tpu_custom_call.1} parent=15 // pred_fallthru
          _
      $region16: #{tpu_custom_call.1} parent=5 // pred_fallthru
        _
      %p211 = scmp.le.s32.totalorder 1, %s16
      %p212 = scmp.lt.s32.totalorder %s16, 3
      %p213 = pnand %p211, %p212
      %p214 = pneg %p213
      // Predicated region
      $region25: #{tpu_custom_call.1} parent=5 // pred_check
        _
      $region26: #{tpu_custom_call.1} parent=5 // pred_check_branch
        %216 = sbr.rel (%p213) target = $region28
      $region27: #{tpu_custom_call.1} parent=5 // pred_region
        %s217 = ssub.s32 %s16, 1
        %s218 = sand.u32 %s47, 1
        %s219 = scalar_lea.sflag [#allocation5], %s218
        %s220 = sand.u32 %s47, 1
        %s221 = smul.addr %s220, 16
        %s222 = scalar_lea.vmem [#allocation4], %s221
        // Predicated region
        $region29: #{tpu_custom_call.1} parent=27 // pred_check
          %p223 = pneg %p60
        $region30: #{tpu_custom_call.1} parent=27 // pred_check_branch
          %225 = sbr.rel (%p223) target = $region32
        $region31: #{tpu_custom_call.1} parent=27 // pred_region
          %226 = dma.done %s219, 256
        $region32: #{tpu_custom_call.1} parent=27 // pred_fallthru
          _
        %s227 = sand.u32 %s79, 1
        %s228 = scalar_lea.sflag [#allocation7], %s227
        %s229 = sand.u32 %s79, 1
        %s230 = smul.addr %s229, 16
        %s231 = scalar_lea.vmem [#allocation6], %s230
        // Predicated region
        $region33: #{tpu_custom_call.1} parent=27 // pred_check
          %p232 = pneg %p92
        $region34: #{tpu_custom_call.1} parent=27 // pred_check_branch
          %234 = sbr.rel (%p232) target = $region36
        $region35: #{tpu_custom_call.1} parent=27 // pred_region
          %235 = dma.done %s228, 256
        $region36: #{tpu_custom_call.1} parent=27 // pred_fallthru
          _
        %s236 = sand.u32 %s47, 1
        %s237 = scalar_lea.sflag [#allocation5], %s236
        %s238 = sand.u32 %s47, 1
        %s239 = smul.addr %s238, 16
        %s240 = scalar_lea.vmem [#allocation4], %s239
        %p241 = pneg %p60
        %p242 = pneg %p57
        %s243 = sand.u32 %s79, 1
        %s244 = scalar_lea.sflag [#allocation7], %s243
        %s245 = sand.u32 %s79, 1
        %s246 = smul.addr %s245, 16
        %s247 = scalar_lea.vmem [#allocation6], %s246
        %p248 = pneg %p92
        %p249 = pneg %p89
        %p250 = pneg %p118
        %p251 = pneg %p115
        %p252 = scmp.lt.s32.totalorder %s25, 1
        %s253 = scalar_select %p252, %s25, 1
        %s254 = scalar_lea.vmem %s2, %s253
        %p255 = pneg %p144
        %p256 = pneg %p141
        %p257 = scmp.lt.s32.totalorder %s25, 1
        %s258 = scalar_select %p257, %s25, 1
        %s259 = scalar_lea.vmem %s3, %s258
        %s260 = sadd.s32 %s25, %s26
        %p261 = scmp.lt.s32.totalorder %s260, 0
        %s262 = scalar_select %p261, %s260, 0
        %s263 = smul.u32 2, %s262
        %s264 = sadd.s32 %s25, %s26
        %p265 = scmp.lt.s32.totalorder %s264, 0
        %s266 = scalar_select %p265, %s264, 0
        %s267 = smul.u32 2, %s266
        %p268 = scmp.lt.s32.totalorder %s25, 1
        %s269 = scalar_select %p268, %s25, 1
        %s270 = scalar_lea.vmem %s2, %s269
        %p271 = scmp.lt.s32.totalorder %s25, 1
        %s272 = scalar_select %p271, %s25, 1
        %s273 = scalar_lea.vmem %s3, %s272
        %p274 = scmp.eq.s32.totalorder %s26, 0
        // Predicated region
        $region37: #{tpu_custom_call.1} parent=27 // pred_check
          %p275 = pneg %p274
        $region38: #{tpu_custom_call.1} parent=27 // pred_check_branch
          %277 = sbr.rel (%p275) target = $region40
        $region39: #{tpu_custom_call.1} parent=27 // pred_region
          %278 = vst [vmem:[#allocation2] sm:$0xff] 0.0
          %279 = vst [vmem:[#allocation2 + $0x8] sm:$0xff] 0.0
          %280 = vst [vmem:[#allocation3] sm:$0xff] 0.0
          %281 = vst [vmem:[#allocation3 + $0x8] sm:$0xff] 0.0
        $region40: #{tpu_custom_call.1} parent=27 // pred_fallthru
          _
        %s282 = sadd.s32 %s25, %s26
        %s283 = smul.u32 %s282, 16
        %v284 = vlaneseq
        %v285 = vshrl.u32 %v284, 7
        %v286 = vadd.s32 %v285, 8
        %v287 = vstv %s283
        %v288 = vadd.s32 %v285, %v287
        %v289 = vadd.s32 %v286, %v287
        %vm290 = vcmp.lt.s32.totalorder %v288, 16
        %vm291 = vcmp.lt.s32.totalorder %v289, 16
        %v292 = vld [vmem:[%s222] sm:$0xff]
        %v293 = vld [vmem:[%s222 + $0x8] sm:$0xff]
        %v294 = vld [vmem:[%s231] sm:$0xff]
        %v295 = vld [vmem:[%s231 + $0x8] sm:$0xff]
        %vm296 = vcmp.eq.f32.partialorder %v294, 1.0
        %vm297 = vcmp.eq.f32.partialorder %v295, 1.0
        %vm298 = vmand %vm290, %vm296
        %vm299 = vmand %vm291, %vm297
        %vm300 = vcmp.lt.f32.partialorder %v294, 1.0
        %vm301 = vcmp.lt.f32.partialorder %v295, 1.0
        %vm302 = vmand %vm290, %vm300
        %vm303 = vmand %vm291, %vm301
        %v304 = vmax.f32 %v292, 0.0001
        %v305 = vmax.f32 %v293, 0.0001
        %v306 = vmin.f32 %v304, 0.9999
        %v307 = vmin.f32 %v305, 0.9999
        %v308 = vsub.f32 1.0, %v306
        %v309 = vsub.f32 1.0, %v307
        %v310 = vsel %vm298, %v306, %v308
        %v311 = vsel %vm299, %v307, %v309
        %v312 = vlog2.pop %v310
        %v313 = vmul.f32 %v312, 0.6931472
        %v314 = vlog2.pop %v311
        %v315 = vmul.f32 %v314, 0.6931472
        %v316 = vmul.f32 %v308, %v308
        %v317 = vmul.f32 %v309, %v309
        %v318 = vmul.f32 %v306, %v306
        %v319 = vmul.f32 %v307, %v307
        %v320 = vsub.f32 1.0, %v294
        %v321 = vsub.f32 1.0, %v295
        %v322 = vmul.f32 %v320, %v320
        %v323 = vmul.f32 %v321, %v321
        %v324 = vmul.f32 %v322, %v322
        %v325 = vmul.f32 %v323, %v323
        %v326 = vmul.f32 %v318, %v324
        %v327 = vmul.f32 %v319, %v325
        %v328 = vsel %vm302, %v326, 0.0
        %v329 = vsel %vm303, %v327, 0.0
        %v330 = vsel %vm298, %v316, %v328
        %v331 = vsel %vm299, %v317, %v329
        %v332 = vld [vmem:[#allocation2] sm:$0xff]
        %v333 = vld [vmem:[#allocation2 + $0x8] sm:$0xff]
        %v334 = vmul.f32 %v313, %v330
        %v335 = vmul.f32 %v315, %v331
        %v336 = vadd.f32 %v332, %v334
        %v337 = vadd.f32 %v333, %v335
        %338 = vst [vmem:[#allocation2] sm:$0xff] %v336
        %339 = vst [vmem:[#allocation2 + $0x8] sm:$0xff] %v337
        %v340 = vld [vmem:[#allocation3] sm:$0xff]
        %v341 = vld [vmem:[#allocation3 + $0x8] sm:$0xff]
        %v342 = vsel %vm298, 1, 0
        %v343 = vsel %vm299, 1, 0
        %v344 = vcvt.s32.f32 %v342
        %v345 = vcvt.s32.f32 %v343
        %v346 = vadd.f32 %v340, %v344
        %v347 = vadd.f32 %v341, %v345
        %348 = vst [vmem:[#allocation3] sm:$0xff] %v346
        %349 = vst [vmem:[#allocation3 + $0x8] sm:$0xff] %v347
        // Predicated region
        $region41: #{tpu_custom_call.1} parent=27 // pred_check
          %p350 = pneg %p274
        $region42: #{tpu_custom_call.1} parent=27 // pred_check_branch
          %352 = sbr.rel (%p350) target = $region44
        $region43: #{tpu_custom_call.1} parent=27 // pred_region
          %v353 = vld [vmem:[#allocation2] sm:$0xff]
          %v354 = vld [vmem:[#allocation2 + $0x8] sm:$0xff]
          %v355 = vadd.f32 %v353, %v354
          %356 = vadd.xlane.f32.xlu0 %v355
          %v357 = vpop.xlane.xlu0 %356
          %v358 = vrot.slane %v357, 4
          %v359 = vadd.f32 %v357, %v358
          %v360 = vrot.slane %v359, 2
          %v361 = vadd.f32 %v359, %v360
          %v362 = vrot.slane %v361, 1
          %v363 = vadd.f32 %v361, %v362
          %s364 = vtos %v363
          %v365 = vstv %s364
          %v366 = vadd.f32 %v365, 0.0
          %vm367 = vcmask 0
          %368 = vst.msk [vmem:[%s270] sm:$0x1] %vm367, %v366
          %v369 = vld [vmem:[#allocation3] sm:$0xff]
          %v370 = vld [vmem:[#allocation3 + $0x8] sm:$0xff]
          %v371 = vadd.f32 %v369, %v370
          %372 = vadd.xlane.f32.xlu0 %v371
          %v373 = vpop.xlane.xlu0 %372
          %v374 = vrot.slane %v373, 4
          %v375 = vadd.f32 %v373, %v374
          %v376 = vrot.slane %v375, 2
          %v377 = vadd.f32 %v375, %v376
          %v378 = vrot.slane %v377, 1
          %v379 = vadd.f32 %v377, %v378
          %s380 = vtos %v379
          %v381 = vstv %s380
          %v382 = vadd.f32 %v381, 0.0
          %383 = vst.msk [vmem:[%s273] sm:$0x1] %vm367, %v382
        $region44: #{tpu_custom_call.1} parent=27 // pred_fallthru
          _
        %p384 = scmp.lt.s32.totalorder %s25, 1
        %s385 = scalar_select %p384, %s25, 1
        %s386 = scalar_lea.vmem %s2, %s385
        %p387 = scmp.lt.s32.totalorder %s25, 1
        %s388 = scalar_select %p387, %s25, 1
        %s389 = scalar_lea.vmem %s3, %s388
        // Predicated region
        $region45: #{tpu_custom_call.1} parent=27 // pred_check
          %p390 = pneg %p115
        $region46: #{tpu_custom_call.1} parent=27 // pred_check_branch
          %392 = sbr.rel (%p390) target = $region48
        $region47: #{tpu_custom_call.1} parent=27 // pred_region
          _
        $region48: #{tpu_custom_call.1} parent=27 // pred_fallthru
          _
        // Predicated region
        $region49: #{tpu_custom_call.1} parent=27 // pred_check
          %p393 = pneg %p141
        $region50: #{tpu_custom_call.1} parent=27 // pred_check_branch
          %395 = sbr.rel (%p393) target = $region52
        $region51: #{tpu_custom_call.1} parent=27 // pred_region
          _
        $region52: #{tpu_custom_call.1} parent=27 // pred_fallthru
          _
      $region28: #{tpu_custom_call.1} parent=5 // pred_fallthru
        _
      %p396 = scmp.le.s32.totalorder 2, %s16
      // Predicated region
      $region53: #{tpu_custom_call.1} parent=5 // pred_check
        %p397 = pneg %p396
      $region54: #{tpu_custom_call.1} parent=5 // pred_check_branch
        %399 = sbr.rel (%p397) target = $region56
      $region55: #{tpu_custom_call.1} parent=5 // pred_region
        %s400 = ssub.s32 %s16, 2
        // Predicated region
        $region57: #{tpu_custom_call.1} parent=55 // pred_check
          %p401 = pneg %p121
        $region58: #{tpu_custom_call.1} parent=55 // pred_check_branch
          %403 = sbr.rel (%p401) target = $region60
        $region59: #{tpu_custom_call.1} parent=55 // pred_region
          %p404 = scmp.lt.s32.totalorder %s27, 1
          %s405 = scalar_select %p404, %s27, 1
          %s406 = scalar_lea.vmem %s2, %s405
        $region60: #{tpu_custom_call.1} parent=55 // pred_fallthru
          _
        // Predicated region
        $region61: #{tpu_custom_call.1} parent=55 // pred_check
          %p407 = pneg %p147
        $region62: #{tpu_custom_call.1} parent=55 // pred_check_branch
          %409 = sbr.rel (%p407) target = $region64
        $region63: #{tpu_custom_call.1} parent=55 // pred_region
          %p410 = scmp.lt.s32.totalorder %s27, 1
          %s411 = scalar_select %p410, %s27, 1
          %s412 = scalar_lea.vmem %s3, %s411
        $region64: #{tpu_custom_call.1} parent=55 // pred_fallthru
          _
      $region56: #{tpu_custom_call.1} parent=5 // pred_fallthru
        _
    $region6: #{tpu_custom_call.1} parent=1 // loop_footer
      %s20 = sadd.s32 1, %s16
    $region7: #{tpu_custom_call.1} parent=1 // loop_footer_branch
      %15 = sbr.rel target = $region3
    $region8: #{tpu_custom_call.1} parent=1 // loop_exit
      _
    %413 = vsyncpa [#allocation5], 1
    %s414 = scalar_lea.sflag [#allocation5], 1
    %415 = vsyncpa %s414, 1
    %416 = vsyncpa [#allocation7], 1
    %s417 = scalar_lea.sflag [#allocation7], 1
    %418 = vsyncpa %s417, 1

</llo_original>
